<compile_context>
chip_gen: v7x
topology: tpu7x:2x2x1
jax: 0.10.0
libtpu: 0.0.40
codegen_flags: <defaults>
</compile_context>

<pallas_src>
import functools

import jax
import jax.numpy as jnp
from jax.experimental import pallas as pl
from jax.experimental.pallas import tpu as pltpu


def _morph_kernel(w_ref, m_ref, x_ref, o_ref, *, C, W, k, HWp, ME, bt,
                  op_type, soft_max):
    """One grid step processes bt batch elements folded into the sublane axis.

    w_ref: (bt*C, k*k)  VMEM -- morphological weights, tiled per batch element
    m_ref: (k, 1, ME)   VMEM -- per-kj W-border validity mask (1.0 / 0.0), W-periodic
    x_ref: (bt*C, L)    VMEM -- H-padded, spatially flattened input rows
    o_ref: (bt*C, HWp)  VMEM -- lane-dense output (wrapper slices to H*W, reshapes)
    """
    p = k // 2
    need_dil = op_type in ("dilation2d", "gradient2d")
    need_ero = op_type in ("erosion2d", "gradient2d")

    xv = x_ref[...]                                   # load the input tile once

    # Pre-masked, kj-shifted row bands: ONE mask multiply per kj (not per tap).
    # The mask is W-periodic, so the later ki*W shift keeps it aligned.
    bands = []
    for kj in range(k):
        band = xv[:, kj:kj + ME]                      # static lane shift (XLU slot)
        if kj != p:                                   # center column never masked
            band = band * m_ref[kj]                   # (1, ME) sublane broadcast
        bands.append(band)

    dil = None
    ero = None
    for ki in range(k):
        off = ki * W
        for kj in range(k):
            patch = bands[kj][:, off:off + HWp]       # (bt*C, HWp) shifted view
            t = ki * k + kj
            wt = w_ref[:, t:t + 1]                    # (bt*C, 1) -> lane broadcast
            if need_dil:
                d = patch + wt
                dil = d if dil is None else jnp.maximum(dil, d)
            if need_ero:
                e = patch - wt
                ero = e if ero is None else jnp.minimum(ero, e)

    if op_type == "dilation2d":
        res = dil
    elif op_type == "erosion2d":
        res = ero
    else:                                             # gradient2d (keep f32 subtract)
        res = dil.astype(jnp.float32) - ero.astype(jnp.float32)

    if soft_max:
        # Softmax over channels (groups of C consecutive sublanes), in f32, from the
        # live accumulator.  Static sublane slices + concat keep a single store.
        res = res.astype(jnp.float32)
        parts = []
        for b in range(bt):
            blk = res[b * C:(b + 1) * C, :]           # (C, HWp)
            mx = jnp.max(blk, axis=0, keepdims=True)
            e = jnp.exp(blk - mx)
            s = jnp.sum(e, axis=0, keepdims=True)
            inv = pl.reciprocal(s, approx=True)       # EUP slot (free here)
            inv = inv * (2.0 - s * inv)               # one Newton step -> ~f32 exact
            parts.append(e * inv)
        res = parts[0] if bt == 1 else jnp.concatenate(parts, axis=0)

    o_ref[...] = res.astype(o_ref.dtype)              # single, lane-dense store


def morphology_forward(x, weight, *, kernel_size=5, soft_max=True, dilation=1,
                       op_type="gradient2d", compute_dtype=None):
    """x: (B, C, H, W).  weight: (C, k, k).  Returns (B, C, H, W) in x.dtype."""
    if op_type not in ("dilation2d", "erosion2d", "gradient2d"):
        raise ValueError(op_type)
    if dilation != 1:
        # TODO(synk): only dilation=1 supported (matches the module's stated support).
        raise NotImplementedError
    B, C, H, W = x.shape
    k = kernel_size
    assert k % 2 == 1, "padding='same' is only centered for odd kernel_size"
    p = k // 2
    HW = H * W
    HWp = ((HW + 127) // 128) * 128                   # lane-dense output width
    ME = HWp + (k - 1) * W                            # pre-masked band length
    Hp = H + 2 * p
    cdt = jnp.dtype(compute_dtype) if compute_dtype is not None else x.dtype

    # ---- Layout plumbing (XLA side): H-only zero pad, flatten spatial dims, fold
    # batch into the sublane axis so every kernel op runs on full-sublane tiles.
    needed = max(p + Hp * W, (k - 1) + (k - 1) * W + HWp)
    L = ((needed + 127) // 128) * 128
    xh = jnp.pad(x, ((0, 0), (0, 0), (p, p), (0, 0)))                  # (B, C, Hp, W)
    xflat = jnp.pad(xh.reshape(B, C, Hp * W),
                    ((0, 0), (0, 0), (p, L - p - Hp * W)))             # (B, C, L)
    xflat = xflat.reshape(B * C, L).astype(cdt)

    # W-border validity mask per kj (W-periodic over the padded flat axis).
    reps = -(-ME // W)
    col = jnp.tile(jnp.arange(W, dtype=jnp.int32), reps)[:ME]          # (ME,)
    wmask = jnp.stack(
        [((col + kj - p >= 0) & (col + kj - p < W)).astype(cdt)
         for kj in range(k)])[:, None, :]                              # (k, 1, ME)

    w2 = weight.reshape(C, k * k).astype(cdt)                          # (C, k*k)

    # ---- Generation-aware VMEM budget + batch-tile (bt) selection.
    try:
        info = pltpu.get_tpu_info()
        vmem_cap = int(getattr(info, "vmem_capacity_bytes", 64 << 20))
    except Exception:
        vmem_cap = 64 << 20                                            # safe on all gens
    vmem_limit = min(vmem_cap * 3 // 4, 112 << 20)
    isz = jnp.dtype(cdt).itemsize
    fixed = (k * 8 * (((ME + 127) // 128) * 128) + 8 * 128) * isz      # masks + weights

    def step_bytes(bt):  # double-buffered input + output blocks per grid step
        return 2 * bt * C * (L * isz + HWp * x.dtype.itemsize) + fixed

    divs = [d for d in range(1, B + 1) if B % d == 0]
    legal = [d for d in divs if (d * C) % 8 == 0 or d == B]            # block-shape legal
    cands = [d for d in legal if step_bytes(d) <= vmem_limit // 2]
    if not cands:
        cands = [min(legal)]   # TODO(synk): spatial halo tiling for huge H*W instead
    # prefer full-sublane blocks, then >=2 grid steps (v7x megacore), then bigger bt.
    bt = max(cands, key=lambda d: ((d * C) % 8 == 0, B // d >= 2, d))
    btC = bt * C

    wfold = jnp.tile(w2, (bt, 1))                                      # (btC, k*k)

    kernel = functools.partial(_morph_kernel, C=C, W=W, k=k, HWp=HWp, ME=ME,
                               bt=bt, op_type=op_type, soft_max=soft_max)

    out = pl.pallas_call(
        kernel,
        out_shape=jax.ShapeDtypeStruct((B * C, HWp), x.dtype),
        grid=(B // bt,),
        in_specs=[
            pl.BlockSpec((btC, k * k), lambda i: (0, 0)),              # weights (VMEM)
            pl.BlockSpec((k, 1, ME), lambda i: (0, 0, 0)),             # border masks
            pl.BlockSpec((btC, L), lambda i: (i, 0)),                  # input rows
        ],
        out_specs=pl.BlockSpec((btC, HWp), lambda i: (i, 0)),
        compiler_params=pltpu.CompilerParams(
            dimension_semantics=("parallel",),
            vmem_limit_bytes=vmem_limit),
    )(wfold, wmask, xflat)

    return out[:, :HW].reshape(B, C, H, W)


def morphology_reference(x, weight, *, kernel_size=5, soft_max=True, op_type="gradient2d"):
    """Pure-JAX reference reproducing the PyTorch unfold-based forward."""
    B, C, H, W = x.shape
    k = kernel_size
    p = k // 2
    xp = jnp.pad(x, ((0, 0), (0, 0), (p, p), (p, p)))
    dil = jnp.full((B, C, H, W), -jnp.inf, dtype=jnp.float32)
    ero = jnp.full((B, C, H, W), jnp.inf, dtype=jnp.float32)
    for ki in range(k):
        for kj in range(k):
            patch = xp[:, :, ki:ki + H, kj:kj + W]
            wv = weight[:, ki, kj][None, :, None, None]
            dil = jnp.maximum(dil, patch + wv)
            ero = jnp.minimum(ero, patch - wv)
    if op_type == "dilation2d":
        res = dil
    elif op_type == "erosion2d":
        res = ero
    else:
        res = dil - ero
    if soft_max:
        res = jax.nn.softmax(res, axis=1)   # softmax over channels per spatial position
    return res


if __name__ == "__main__":
    key = jax.random.PRNGKey(0)
    kx, kw = jax.random.split(key)

    B, C, H, W, K = 2, 4, 16, 16, 5
    x = jax.random.normal(kx, (B, C, H, W), dtype=jnp.float32)
    # The module's __init__ uses zeros of shape (C, K, K); use small deterministic
    # values so the weight path is actually exercised.
    weight = 0.1 * jax.random.normal(kw, (C, K, K), dtype=jnp.float32)

    ok = True
    for op_type, soft_max in [("gradient2d", True),
                              ("dilation2d", False),
                              ("erosion2d", True)]:
        out = morphology_forward(x, weight, kernel_size=K, soft_max=soft_max,
                                 op_type=op_type)
        out = jax.block_until_ready(out)
        ref = morphology_reference(x, weight, kernel_size=K, soft_max=soft_max,
                                   op_type=op_type)
        assert out.shape == (B, C, H, W)
        assert out.dtype == jnp.float32
        if not jnp.allclose(out, ref, atol=2e-5, rtol=2e-5):
            ok = False
            print(f"MISMATCH for {op_type} soft_max={soft_max}: "
                  f"max abs err {jnp.max(jnp.abs(out - ref))}")

    if ok:
        print("KERNEL_OK")
</pallas_src>

<mosaic_0001>
module attributes {stable_mosaic.version = 11 : i64} {
  func.func @_morph_kernel(%arg0: i32, %arg1: memref<8x25xf32, #tpu.memory_space<vmem>>, %arg2: memref<5x1x320xf32, #tpu.memory_space<vmem>>, %arg3: memref<8x384xf32, #tpu.memory_space<vmem>>, %arg4: memref<8x256xf32, #tpu.memory_space<vmem>>) attributes {dimension_semantics = [#tpu.dimension_semantics<parallel>], iteration_bounds = array<i64: 1>, scalar_prefetch = 0 : i64, scratch_operands = 0 : i64, tpu.core_type = #tpu.core_type<tc>, window_params = [{pipeline_mode = #tpu.pipeline_mode<synchronous>, transform_indices = @transform_0, window_bounds = array<i64: 8, 25>}, {pipeline_mode = #tpu.pipeline_mode<synchronous>, transform_indices = @transform_1, window_bounds = array<i64: 5, 1, 320>}, {transform_indices = @transform_2, window_bounds = array<i64: 8, 384>}, {transform_indices = @transform_3, window_bounds = array<i64: 8, 256>}]} {
    %c0 = arith.constant 0 : index
    %c0_0 = arith.constant 0 : index
    %0 = vector.load %arg3[%c0, %c0_0] : memref<8x384xf32, #tpu.memory_space<vmem>>, vector<8x384xf32>
    %1 = vector.extract_strided_slice %0 {offsets = [0, 0], sizes = [8, 320], strides = [1, 1]} : vector<8x384xf32> to vector<8x320xf32>
    %c0_1 = arith.constant 0 : index
    %c0_2 = arith.constant 0 : index
    %c0_3 = arith.constant 0 : index
    %2 = vector.load %arg2[%c0_1, %c0_2, %c0_3] : memref<5x1x320xf32, #tpu.memory_space<vmem>>, vector<1x1x320xf32>
    %3 = vector.shape_cast %2 : vector<1x1x320xf32> to vector<1x320xf32>
    %4 = vector.broadcast %3 : vector<1x320xf32> to vector<8x320xf32>
    %5 = arith.mulf %1, %4 : vector<8x320xf32>
    %6 = vector.extract_strided_slice %0 {offsets = [0, 1], sizes = [8, 320], strides = [1, 1]} : vector<8x384xf32> to vector<8x320xf32>
    %c1 = arith.constant 1 : index
    %c0_4 = arith.constant 0 : index
    %c0_5 = arith.constant 0 : index
    %7 = vector.load %arg2[%c1, %c0_4, %c0_5] : memref<5x1x320xf32, #tpu.memory_space<vmem>>, vector<1x1x320xf32>
    %8 = vector.shape_cast %7 : vector<1x1x320xf32> to vector<1x320xf32>
    %9 = vector.broadcast %8 : vector<1x320xf32> to vector<8x320xf32>
    %10 = arith.mulf %6, %9 : vector<8x320xf32>
    %11 = vector.extract_strided_slice %0 {offsets = [0, 2], sizes = [8, 320], strides = [1, 1]} : vector<8x384xf32> to vector<8x320xf32>
    %12 = vector.extract_strided_slice %0 {offsets = [0, 3], sizes = [8, 320], strides = [1, 1]} : vector<8x384xf32> to vector<8x320xf32>
    %c3 = arith.constant 3 : index
    %c0_6 = arith.constant 0 : index
    %c0_7 = arith.constant 0 : index
    %13 = vector.load %arg2[%c3, %c0_6, %c0_7] : memref<5x1x320xf32, #tpu.memory_space<vmem>>, vector<1x1x320xf32>
    %14 = vector.shape_cast %13 : vector<1x1x320xf32> to vector<1x320xf32>
    %15 = vector.broadcast %14 : vector<1x320xf32> to vector<8x320xf32>
    %16 = arith.mulf %12, %15 : vector<8x320xf32>
    %17 = vector.extract_strided_slice %0 {offsets = [0, 4], sizes = [8, 320], strides = [1, 1]} : vector<8x384xf32> to vector<8x320xf32>
    %c4 = arith.constant 4 : index
    %c0_8 = arith.constant 0 : index
    %c0_9 = arith.constant 0 : index
    %18 = vector.load %arg2[%c4, %c0_8, %c0_9] : memref<5x1x320xf32, #tpu.memory_space<vmem>>, vector<1x1x320xf32>
    %19 = vector.shape_cast %18 : vector<1x1x320xf32> to vector<1x320xf32>
    %20 = vector.broadcast %19 : vector<1x320xf32> to vector<8x320xf32>
    %21 = arith.mulf %17, %20 : vector<8x320xf32>
    %22 = vector.extract_strided_slice %5 {offsets = [0, 0], sizes = [8, 256], strides = [1, 1]} : vector<8x320xf32> to vector<8x256xf32>
    %c0_10 = arith.constant 0 : index
    %c0_11 = arith.constant 0 : index
    %23 = vector.load %arg1[%c0_10, %c0_11] : memref<8x25xf32, #tpu.memory_space<vmem>>, vector<8x1xf32>
    %24 = vector.broadcast %23 : vector<8x1xf32> to vector<8x256xf32>
    %25 = arith.addf %22, %24 : vector<8x256xf32>
    %26 = vector.broadcast %23 : vector<8x1xf32> to vector<8x256xf32>
    %27 = arith.subf %22, %26 : vector<8x256xf32>
    %28 = vector.extract_strided_slice %10 {offsets = [0, 0], sizes = [8, 256], strides = [1, 1]} : vector<8x320xf32> to vector<8x256xf32>
    %c0_12 = arith.constant 0 : index
    %c1_13 = arith.constant 1 : index
    %29 = vector.load %arg1[%c0_12, %c1_13] : memref<8x25xf32, #tpu.memory_space<vmem>>, vector<8x1xf32>
    %30 = vector.broadcast %29 : vector<8x1xf32> to vector<8x256xf32>
    %31 = arith.addf %28, %30 : vector<8x256xf32>
    %32 = arith.maximumf %25, %31 : vector<8x256xf32>
    %33 = vector.broadcast %29 : vector<8x1xf32> to vector<8x256xf32>
    %34 = arith.subf %28, %33 : vector<8x256xf32>
    %35 = arith.minimumf %27, %34 : vector<8x256xf32>
    %36 = vector.extract_strided_slice %11 {offsets = [0, 0], sizes = [8, 256], strides = [1, 1]} : vector<8x320xf32> to vector<8x256xf32>
    %c0_14 = arith.constant 0 : index
    %c2 = arith.constant 2 : index
    %37 = vector.load %arg1[%c0_14, %c2] : memref<8x25xf32, #tpu.memory_space<vmem>>, vector<8x1xf32>
    %38 = vector.broadcast %37 : vector<8x1xf32> to vector<8x256xf32>
    %39 = arith.addf %36, %38 : vector<8x256xf32>
    %40 = arith.maximumf %32, %39 : vector<8x256xf32>
    %41 = vector.broadcast %37 : vector<8x1xf32> to vector<8x256xf32>
    %42 = arith.subf %36, %41 : vector<8x256xf32>
    %43 = arith.minimumf %35, %42 : vector<8x256xf32>
    %44 = vector.extract_strided_slice %16 {offsets = [0, 0], sizes = [8, 256], strides = [1, 1]} : vector<8x320xf32> to vector<8x256xf32>
    %c0_15 = arith.constant 0 : index
    %c3_16 = arith.constant 3 : index
    %45 = vector.load %arg1[%c0_15, %c3_16] : memref<8x25xf32, #tpu.memory_space<vmem>>, vector<8x1xf32>
    %46 = vector.broadcast %45 : vector<8x1xf32> to vector<8x256xf32>
    %47 = arith.addf %44, %46 : vector<8x256xf32>
    %48 = arith.maximumf %40, %47 : vector<8x256xf32>
    %49 = vector.broadcast %45 : vector<8x1xf32> to vector<8x256xf32>
    %50 = arith.subf %44, %49 : vector<8x256xf32>
    %51 = arith.minimumf %43, %50 : vector<8x256xf32>
    %52 = vector.extract_strided_slice %21 {offsets = [0, 0], sizes = [8, 256], strides = [1, 1]} : vector<8x320xf32> to vector<8x256xf32>
    %c0_17 = arith.constant 0 : index
    %c4_18 = arith.constant 4 : index
    %53 = vector.load %arg1[%c0_17, %c4_18] : memref<8x25xf32, #tpu.memory_space<vmem>>, vector<8x1xf32>
    %54 = vector.broadcast %53 : vector<8x1xf32> to vector<8x256xf32>
    %55 = arith.addf %52, %54 : vector<8x256xf32>
    %56 = arith.maximumf %48, %55 : vector<8x256xf32>
    %57 = vector.broadcast %53 : vector<8x1xf32> to vector<8x256xf32>
    %58 = arith.subf %52, %57 : vector<8x256xf32>
    %59 = arith.minimumf %51, %58 : vector<8x256xf32>
    %60 = vector.extract_strided_slice %5 {offsets = [0, 16], sizes = [8, 256], strides = [1, 1]} : vector<8x320xf32> to vector<8x256xf32>
    %c0_19 = arith.constant 0 : index
    %c5 = arith.constant 5 : index
    %61 = vector.load %arg1[%c0_19, %c5] : memref<8x25xf32, #tpu.memory_space<vmem>>, vector<8x1xf32>
    %62 = vector.broadcast %61 : vector<8x1xf32> to vector<8x256xf32>
    %63 = arith.addf %60, %62 : vector<8x256xf32>
    %64 = arith.maximumf %56, %63 : vector<8x256xf32>
    %65 = vector.broadcast %61 : vector<8x1xf32> to vector<8x256xf32>
    %66 = arith.subf %60, %65 : vector<8x256xf32>
    %67 = arith.minimumf %59, %66 : vector<8x256xf32>
    %68 = vector.extract_strided_slice %10 {offsets = [0, 16], sizes = [8, 256], strides = [1, 1]} : vector<8x320xf32> to vector<8x256xf32>
    %c0_20 = arith.constant 0 : index
    %c6 = arith.constant 6 : index
    %69 = vector.load %arg1[%c0_20, %c6] : memref<8x25xf32, #tpu.memory_space<vmem>>, vector<8x1xf32>
    %70 = vector.broadcast %69 : vector<8x1xf32> to vector<8x256xf32>
    %71 = arith.addf %68, %70 : vector<8x256xf32>
    %72 = arith.maximumf %64, %71 : vector<8x256xf32>
    %73 = vector.broadcast %69 : vector<8x1xf32> to vector<8x256xf32>
    %74 = arith.subf %68, %73 : vector<8x256xf32>
    %75 = arith.minimumf %67, %74 : vector<8x256xf32>
    %76 = vector.extract_strided_slice %11 {offsets = [0, 16], sizes = [8, 256], strides = [1, 1]} : vector<8x320xf32> to vector<8x256xf32>
    %c0_21 = arith.constant 0 : index
    %c7 = arith.constant 7 : index
    %77 = vector.load %arg1[%c0_21, %c7] : memref<8x25xf32, #tpu.memory_space<vmem>>, vector<8x1xf32>
    %78 = vector.broadcast %77 : vector<8x1xf32> to vector<8x256xf32>
    %79 = arith.addf %76, %78 : vector<8x256xf32>
    %80 = arith.maximumf %72, %79 : vector<8x256xf32>
    %81 = vector.broadcast %77 : vector<8x1xf32> to vector<8x256xf32>
    %82 = arith.subf %76, %81 : vector<8x256xf32>
    %83 = arith.minimumf %75, %82 : vector<8x256xf32>
    %84 = vector.extract_strided_slice %16 {offsets = [0, 16], sizes = [8, 256], strides = [1, 1]} : vector<8x320xf32> to vector<8x256xf32>
    %c0_22 = arith.constant 0 : index
    %c8 = arith.constant 8 : index
    %85 = vector.load %arg1[%c0_22, %c8] : memref<8x25xf32, #tpu.memory_space<vmem>>, vector<8x1xf32>
    %86 = vector.broadcast %85 : vector<8x1xf32> to vector<8x256xf32>
    %87 = arith.addf %84, %86 : vector<8x256xf32>
    %88 = arith.maximumf %80, %87 : vector<8x256xf32>
    %89 = vector.broadcast %85 : vector<8x1xf32> to vector<8x256xf32>
    %90 = arith.subf %84, %89 : vector<8x256xf32>
    %91 = arith.minimumf %83, %90 : vector<8x256xf32>
    %92 = vector.extract_strided_slice %21 {offsets = [0, 16], sizes = [8, 256], strides = [1, 1]} : vector<8x320xf32> to vector<8x256xf32>
    %c0_23 = arith.constant 0 : index
    %c9 = arith.constant 9 : index
    %93 = vector.load %arg1[%c0_23, %c9] : memref<8x25xf32, #tpu.memory_space<vmem>>, vector<8x1xf32>
    %94 = vector.broadcast %93 : vector<8x1xf32> to vector<8x256xf32>
    %95 = arith.addf %92, %94 : vector<8x256xf32>
    %96 = arith.maximumf %88, %95 : vector<8x256xf32>
    %97 = vector.broadcast %93 : vector<8x1xf32> to vector<8x256xf32>
    %98 = arith.subf %92, %97 : vector<8x256xf32>
    %99 = arith.minimumf %91, %98 : vector<8x256xf32>
    %100 = vector.extract_strided_slice %5 {offsets = [0, 32], sizes = [8, 256], strides = [1, 1]} : vector<8x320xf32> to vector<8x256xf32>
    %c0_24 = arith.constant 0 : index
    %c10 = arith.constant 10 : index
    %101 = vector.load %arg1[%c0_24, %c10] : memref<8x25xf32, #tpu.memory_space<vmem>>, vector<8x1xf32>
    %102 = vector.broadcast %101 : vector<8x1xf32> to vector<8x256xf32>
    %103 = arith.addf %100, %102 : vector<8x256xf32>
    %104 = arith.maximumf %96, %103 : vector<8x256xf32>
    %105 = vector.broadcast %101 : vector<8x1xf32> to vector<8x256xf32>
    %106 = arith.subf %100, %105 : vector<8x256xf32>
    %107 = arith.minimumf %99, %106 : vector<8x256xf32>
    %108 = vector.extract_strided_slice %10 {offsets = [0, 32], sizes = [8, 256], strides = [1, 1]} : vector<8x320xf32> to vector<8x256xf32>
    %c0_25 = arith.constant 0 : index
    %c11 = arith.constant 11 : index
    %109 = vector.load %arg1[%c0_25, %c11] : memref<8x25xf32, #tpu.memory_space<vmem>>, vector<8x1xf32>
    %110 = vector.broadcast %109 : vector<8x1xf32> to vector<8x256xf32>
    %111 = arith.addf %108, %110 : vector<8x256xf32>
    %112 = arith.maximumf %104, %111 : vector<8x256xf32>
    %113 = vector.broadcast %109 : vector<8x1xf32> to vector<8x256xf32>
    %114 = arith.subf %108, %113 : vector<8x256xf32>
    %115 = arith.minimumf %107, %114 : vector<8x256xf32>
    %116 = vector.extract_strided_slice %11 {offsets = [0, 32], sizes = [8, 256], strides = [1, 1]} : vector<8x320xf32> to vector<8x256xf32>
    %c0_26 = arith.constant 0 : index
    %c12 = arith.constant 12 : index
    %117 = vector.load %arg1[%c0_26, %c12] : memref<8x25xf32, #tpu.memory_space<vmem>>, vector<8x1xf32>
    %118 = vector.broadcast %117 : vector<8x1xf32> to vector<8x256xf32>
    %119 = arith.addf %116, %118 : vector<8x256xf32>
    %120 = arith.maximumf %112, %119 : vector<8x256xf32>
    %121 = vector.broadcast %117 : vector<8x1xf32> to vector<8x256xf32>
    %122 = arith.subf %116, %121 : vector<8x256xf32>
    %123 = arith.minimumf %115, %122 : vector<8x256xf32>
    %124 = vector.extract_strided_slice %16 {offsets = [0, 32], sizes = [8, 256], strides = [1, 1]} : vector<8x320xf32> to vector<8x256xf32>
    %c0_27 = arith.constant 0 : index
    %c13 = arith.constant 13 : index
    %125 = vector.load %arg1[%c0_27, %c13] : memref<8x25xf32, #tpu.memory_space<vmem>>, vector<8x1xf32>
    %126 = vector.broadcast %125 : vector<8x1xf32> to vector<8x256xf32>
    %127 = arith.addf %124, %126 : vector<8x256xf32>
    %128 = arith.maximumf %120, %127 : vector<8x256xf32>
    %129 = vector.broadcast %125 : vector<8x1xf32> to vector<8x256xf32>
    %130 = arith.subf %124, %129 : vector<8x256xf32>
    %131 = arith.minimumf %123, %130 : vector<8x256xf32>
    %132 = vector.extract_strided_slice %21 {offsets = [0, 32], sizes = [8, 256], strides = [1, 1]} : vector<8x320xf32> to vector<8x256xf32>
    %c0_28 = arith.constant 0 : index
    %c14 = arith.constant 14 : index
    %133 = vector.load %arg1[%c0_28, %c14] : memref<8x25xf32, #tpu.memory_space<vmem>>, vector<8x1xf32>
    %134 = vector.broadcast %133 : vector<8x1xf32> to vector<8x256xf32>
    %135 = arith.addf %132, %134 : vector<8x256xf32>
    %136 = arith.maximumf %128, %135 : vector<8x256xf32>
    %137 = vector.broadcast %133 : vector<8x1xf32> to vector<8x256xf32>
    %138 = arith.subf %132, %137 : vector<8x256xf32>
    %139 = arith.minimumf %131, %138 : vector<8x256xf32>
    %140 = vector.extract_strided_slice %5 {offsets = [0, 48], sizes = [8, 256], strides = [1, 1]} : vector<8x320xf32> to vector<8x256xf32>
    %c0_29 = arith.constant 0 : index
    %c15 = arith.constant 15 : index
    %141 = vector.load %arg1[%c0_29, %c15] : memref<8x25xf32, #tpu.memory_space<vmem>>, vector<8x1xf32>
    %142 = vector.broadcast %141 : vector<8x1xf32> to vector<8x256xf32>
    %143 = arith.addf %140, %142 : vector<8x256xf32>
    %144 = arith.maximumf %136, %143 : vector<8x256xf32>
    %145 = vector.broadcast %141 : vector<8x1xf32> to vector<8x256xf32>
    %146 = arith.subf %140, %145 : vector<8x256xf32>
    %147 = arith.minimumf %139, %146 : vector<8x256xf32>
    %148 = vector.extract_strided_slice %10 {offsets = [0, 48], sizes = [8, 256], strides = [1, 1]} : vector<8x320xf32> to vector<8x256xf32>
    %c0_30 = arith.constant 0 : index
    %c16 = arith.constant 16 : index
    %149 = vector.load %arg1[%c0_30, %c16] : memref<8x25xf32, #tpu.memory_space<vmem>>, vector<8x1xf32>
    %150 = vector.broadcast %149 : vector<8x1xf32> to vector<8x256xf32>
    %151 = arith.addf %148, %150 : vector<8x256xf32>
    %152 = arith.maximumf %144, %151 : vector<8x256xf32>
    %153 = vector.broadcast %149 : vector<8x1xf32> to vector<8x256xf32>
    %154 = arith.subf %148, %153 : vector<8x256xf32>
    %155 = arith.minimumf %147, %154 : vector<8x256xf32>
    %156 = vector.extract_strided_slice %11 {offsets = [0, 48], sizes = [8, 256], strides = [1, 1]} : vector<8x320xf32> to vector<8x256xf32>
    %c0_31 = arith.constant 0 : index
    %c17 = arith.constant 17 : index
    %157 = vector.load %arg1[%c0_31, %c17] : memref<8x25xf32, #tpu.memory_space<vmem>>, vector<8x1xf32>
    %158 = vector.broadcast %157 : vector<8x1xf32> to vector<8x256xf32>
    %159 = arith.addf %156, %158 : vector<8x256xf32>
    %160 = arith.maximumf %152, %159 : vector<8x256xf32>
    %161 = vector.broadcast %157 : vector<8x1xf32> to vector<8x256xf32>
    %162 = arith.subf %156, %161 : vector<8x256xf32>
    %163 = arith.minimumf %155, %162 : vector<8x256xf32>
    %164 = vector.extract_strided_slice %16 {offsets = [0, 48], sizes = [8, 256], strides = [1, 1]} : vector<8x320xf32> to vector<8x256xf32>
    %c0_32 = arith.constant 0 : index
    %c18 = arith.constant 18 : index
    %165 = vector.load %arg1[%c0_32, %c18] : memref<8x25xf32, #tpu.memory_space<vmem>>, vector<8x1xf32>
    %166 = vector.broadcast %165 : vector<8x1xf32> to vector<8x256xf32>
    %167 = arith.addf %164, %166 : vector<8x256xf32>
    %168 = arith.maximumf %160, %167 : vector<8x256xf32>
    %169 = vector.broadcast %165 : vector<8x1xf32> to vector<8x256xf32>
    %170 = arith.subf %164, %169 : vector<8x256xf32>
    %171 = arith.minimumf %163, %170 : vector<8x256xf32>
    %172 = vector.extract_strided_slice %21 {offsets = [0, 48], sizes = [8, 256], strides = [1, 1]} : vector<8x320xf32> to vector<8x256xf32>
    %c0_33 = arith.constant 0 : index
    %c19 = arith.constant 19 : index
    %173 = vector.load %arg1[%c0_33, %c19] : memref<8x25xf32, #tpu.memory_space<vmem>>, vector<8x1xf32>
    %174 = vector.broadcast %173 : vector<8x1xf32> to vector<8x256xf32>
    %175 = arith.addf %172, %174 : vector<8x256xf32>
    %176 = arith.maximumf %168, %175 : vector<8x256xf32>
    %177 = vector.broadcast %173 : vector<8x1xf32> to vector<8x256xf32>
    %178 = arith.subf %172, %177 : vector<8x256xf32>
    %179 = arith.minimumf %171, %178 : vector<8x256xf32>
    %180 = vector.extract_strided_slice %5 {offsets = [0, 64], sizes = [8, 256], strides = [1, 1]} : vector<8x320xf32> to vector<8x256xf32>
    %c0_34 = arith.constant 0 : index
    %c20 = arith.constant 20 : index
    %181 = vector.load %arg1[%c0_34, %c20] : memref<8x25xf32, #tpu.memory_space<vmem>>, vector<8x1xf32>
    %182 = vector.broadcast %181 : vector<8x1xf32> to vector<8x256xf32>
    %183 = arith.addf %180, %182 : vector<8x256xf32>
    %184 = arith.maximumf %176, %183 : vector<8x256xf32>
    %185 = vector.broadcast %181 : vector<8x1xf32> to vector<8x256xf32>
    %186 = arith.subf %180, %185 : vector<8x256xf32>
    %187 = arith.minimumf %179, %186 : vector<8x256xf32>
    %188 = vector.extract_strided_slice %10 {offsets = [0, 64], sizes = [8, 256], strides = [1, 1]} : vector<8x320xf32> to vector<8x256xf32>
    %c0_35 = arith.constant 0 : index
    %c21 = arith.constant 21 : index
    %189 = vector.load %arg1[%c0_35, %c21] : memref<8x25xf32, #tpu.memory_space<vmem>>, vector<8x1xf32>
    %190 = vector.broadcast %189 : vector<8x1xf32> to vector<8x256xf32>
    %191 = arith.addf %188, %190 : vector<8x256xf32>
    %192 = arith.maximumf %184, %191 : vector<8x256xf32>
    %193 = vector.broadcast %189 : vector<8x1xf32> to vector<8x256xf32>
    %194 = arith.subf %188, %193 : vector<8x256xf32>
    %195 = arith.minimumf %187, %194 : vector<8x256xf32>
    %196 = vector.extract_strided_slice %11 {offsets = [0, 64], sizes = [8, 256], strides = [1, 1]} : vector<8x320xf32> to vector<8x256xf32>
    %c0_36 = arith.constant 0 : index
    %c22 = arith.constant 22 : index
    %197 = vector.load %arg1[%c0_36, %c22] : memref<8x25xf32, #tpu.memory_space<vmem>>, vector<8x1xf32>
    %198 = vector.broadcast %197 : vector<8x1xf32> to vector<8x256xf32>
    %199 = arith.addf %196, %198 : vector<8x256xf32>
    %200 = arith.maximumf %192, %199 : vector<8x256xf32>
    %201 = vector.broadcast %197 : vector<8x1xf32> to vector<8x256xf32>
    %202 = arith.subf %196, %201 : vector<8x256xf32>
    %203 = arith.minimumf %195, %202 : vector<8x256xf32>
    %204 = vector.extract_strided_slice %16 {offsets = [0, 64], sizes = [8, 256], strides = [1, 1]} : vector<8x320xf32> to vector<8x256xf32>
    %c0_37 = arith.constant 0 : index
    %c23 = arith.constant 23 : index
    %205 = vector.load %arg1[%c0_37, %c23] : memref<8x25xf32, #tpu.memory_space<vmem>>, vector<8x1xf32>
    %206 = vector.broadcast %205 : vector<8x1xf32> to vector<8x256xf32>
    %207 = arith.addf %204, %206 : vector<8x256xf32>
    %208 = arith.maximumf %200, %207 : vector<8x256xf32>
    %209 = vector.broadcast %205 : vector<8x1xf32> to vector<8x256xf32>
    %210 = arith.subf %204, %209 : vector<8x256xf32>
    %211 = arith.minimumf %203, %210 : vector<8x256xf32>
    %212 = vector.extract_strided_slice %21 {offsets = [0, 64], sizes = [8, 256], strides = [1, 1]} : vector<8x320xf32> to vector<8x256xf32>
    %c0_38 = arith.constant 0 : index
    %c24 = arith.constant 24 : index
    %213 = vector.load %arg1[%c0_38, %c24] : memref<8x25xf32, #tpu.memory_space<vmem>>, vector<8x1xf32>
    %214 = vector.broadcast %213 : vector<8x1xf32> to vector<8x256xf32>
    %215 = arith.addf %212, %214 : vector<8x256xf32>
    %216 = arith.maximumf %208, %215 : vector<8x256xf32>
    %217 = vector.broadcast %213 : vector<8x1xf32> to vector<8x256xf32>
    %218 = arith.subf %212, %217 : vector<8x256xf32>
    %219 = arith.minimumf %211, %218 : vector<8x256xf32>
    %220 = arith.subf %216, %219 : vector<8x256xf32>
    %221 = vector.extract_strided_slice %220 {offsets = [0, 0], sizes = [4, 256], strides = [1, 1]} : vector<8x256xf32> to vector<4x256xf32>
    %cst = arith.constant dense<0xFF800000> : vector<256xf32>
    %222 = vector.multi_reduction <maximumf>, %221, %cst [0] : vector<4x256xf32> to vector<256xf32>
    %223 = vector.shape_cast %222 : vector<256xf32> to vector<1x256xf32>
    %224 = vector.broadcast %223 : vector<1x256xf32> to vector<4x256xf32>
    %225 = arith.subf %221, %224 : vector<4x256xf32>
    %226 = math.exp %225 : vector<4x256xf32>
    %cst_39 = arith.constant dense<0.000000e+00> : vector<256xf32>
    %227 = vector.multi_reduction <add>, %226, %cst_39 [0] : vector<4x256xf32> to vector<256xf32>
    %228 = vector.shape_cast %227 : vector<256xf32> to vector<1x256xf32>
    %229 = tpu.reciprocal %228 {approx = true} : vector<1x256xf32> -> vector<1x256xf32>
    %230 = arith.mulf %228, %229 : vector<1x256xf32>
    %cst_40 = arith.constant 2.000000e+00 : f32
    %231 = vector.broadcast %cst_40 : f32 to vector<1x256xf32>
    %232 = arith.subf %231, %230 : vector<1x256xf32>
    %233 = arith.mulf %229, %232 : vector<1x256xf32>
    %234 = vector.broadcast %233 : vector<1x256xf32> to vector<4x256xf32>
    %235 = arith.mulf %226, %234 : vector<4x256xf32>
    %236 = vector.extract_strided_slice %220 {offsets = [4, 0], sizes = [4, 256], strides = [1, 1]} : vector<8x256xf32> to vector<4x256xf32>
    %cst_41 = arith.constant dense<0xFF800000> : vector<256xf32>
    %237 = vector.multi_reduction <maximumf>, %236, %cst_41 [0] : vector<4x256xf32> to vector<256xf32>
    %238 = vector.shape_cast %237 : vector<256xf32> to vector<1x256xf32>
    %239 = vector.broadcast %238 : vector<1x256xf32> to vector<4x256xf32>
    %240 = arith.subf %236, %239 : vector<4x256xf32>
    %241 = math.exp %240 : vector<4x256xf32>
    %cst_42 = arith.constant dense<0.000000e+00> : vector<256xf32>
    %242 = vector.multi_reduction <add>, %241, %cst_42 [0] : vector<4x256xf32> to vector<256xf32>
    %243 = vector.shape_cast %242 : vector<256xf32> to vector<1x256xf32>
    %244 = tpu.reciprocal %243 {approx = true} : vector<1x256xf32> -> vector<1x256xf32>
    %245 = arith.mulf %243, %244 : vector<1x256xf32>
    %cst_43 = arith.constant 2.000000e+00 : f32
    %246 = vector.broadcast %cst_43 : f32 to vector<1x256xf32>
    %247 = arith.subf %246, %245 : vector<1x256xf32>
    %248 = arith.mulf %244, %247 : vector<1x256xf32>
    %249 = vector.broadcast %248 : vector<1x256xf32> to vector<4x256xf32>
    %250 = arith.mulf %241, %249 : vector<4x256xf32>
    %251 = tpu.concatenate %235, %250 in 0 : vector<4x256xf32>, vector<4x256xf32> -> vector<8x256xf32>
    %c0_44 = arith.constant 0 : index
    %c0_45 = arith.constant 0 : index
    %252 = vector.load %arg4[%c0_44, %c0_45] : memref<8x256xf32, #tpu.memory_space<vmem>>, vector<8x256xf32>
    tpu.vector_store %arg4[%c0_44, %c0_45], %251 {strides = array<i32>} : memref<8x256xf32, #tpu.memory_space<vmem>>, vector<8x256xf32>,
    return
  }
  func.func @transform_0(%arg0: i32) -> (i32, i32) {
    %c0_i32 = arith.constant 0 : i32
    %c0_i32_0 = arith.constant 0 : i32
    %c0_i32_1 = arith.constant 0 : i32
    return %c0_i32, %c0_i32_0 : i32, i32
  }
  func.func @transform_1(%arg0: i32) -> (i32, i32, i32) {
    %c0_i32 = arith.constant 0 : i32
    %c0_i32_0 = arith.constant 0 : i32
    %c0_i32_1 = arith.constant 0 : i32
    %c0_i32_2 = arith.constant 0 : i32
    return %c0_i32, %c0_i32_0, %c0_i32_1 : i32, i32, i32
  }
  func.func @transform_2(%arg0: i32) -> (i32, i32) {
    %c0_i32 = arith.constant 0 : i32
    %c0_i32_0 = arith.constant 0 : i32
    return %arg0, %c0_i32 : i32, i32
  }
  func.func @transform_3(%arg0: i32) -> (i32, i32) {
    %c0_i32 = arith.constant 0 : i32
    %c0_i32_0 = arith.constant 0 : i32
    return %arg0, %c0_i32 : i32, i32
  }
}

</mosaic_0001>

<llo_original>
// kernel: tpu_custom_call.1
$region0: #{tpu_custom_call.1}
  #allocation0 [shape = 'u32[]', space=smem, size = 0x4, offset = 0x4, fixed_abs, tag = 'smem constant byte address 0x4 - core index']
  #allocation1 [shape = 'u32[144,128]{1,0:T(1,128)}', space=vmem, size = 0x12000, scoped, tag = 'internal scratch']
  %s0 = inlined_call_operand.hbm [shape: f32[8,25], index: 0, kind: input, shape index: {}]
  %s1 = inlined_call_operand.hbm [shape: f32[5,1,320], index: 1, kind: input, shape index: {}]
  %s2 = inlined_call_operand.hbm [shape: f32[8,384], index: 2, kind: input, shape index: {}]
  %s3 = inlined_call_operand.hbm [shape: f32[8,256], index: 3, kind: output, shape index: {}]
  %s4 = sld [smem:[#allocation0]]
  $region34: #{tpu_custom_call.1} parent=0
    _
  %s6 = ssub.s32 1, %s4
  %s7 = scalar_select 0, %s6, %s4
  $region1: #{tpu_custom_call.1} parent=0
    #allocation2 [shape = 'u8[4096]{0}', space=vmem, size = 0x1000, scoped, tag = 'input window, operand 0, single buffered']
    #allocation3 [shape = 's32[1]{0}', space=sflag, size = 0x4, scoped, tag = 'scoped memory for tpu_custom_call.1']
    #allocation4 [shape = 's32[1]{0}', space=sflag, size = 0x4, scoped, tag = 'scoped memory for tpu_custom_call.1']
    #allocation5 [shape = 'u8[7680]{0}', space=vmem, size = 0x2000, scoped, tag = 'input window, operand 1, single buffered']
    #allocation6 [shape = 's32[1]{0}', space=sflag, size = 0x4, scoped, tag = 'scoped memory for tpu_custom_call.1']
    #allocation7 [shape = 'u8[12288]{0}', space=vmem, size = 0x3000, scoped, tag = 'input window, operand 2, single buffered']
    #allocation8 [shape = 'u8[8192]{0}', space=vmem, size = 0x2000, scoped, tag = 'output window, operand 0, single buffered']
    %8 = vsyncpa [#allocation3], 0
    %9 = vsyncpa [#allocation6], 0
    %10 = vsyncpa [#allocation4], 0
    // Predicated region
    $region2: #{tpu_custom_call.1} parent=1 // pred_check
      _
    $region3: #{tpu_custom_call.1} parent=1 // pred_check_branch
      %12 = sbr.rel (0) target = $region5
    $region4: #{tpu_custom_call.1} parent=1 // pred_region
      %s14 = ssub.s32 128, 128
      %15 = vsyncadd [#allocation3], %s14
      %s17 = sshll.u32 [#allocation2], 4
      %s18 = int_to_ptr.vmem [resolvable:$true] %s17
      %20 = dma.hbm_to_vmem [thread:$0]  %s0, 128, %s18, [#allocation3]
    $region5: #{tpu_custom_call.1} parent=1 // pred_fallthru
      _
    // Predicated region
    $region6: #{tpu_custom_call.1} parent=1 // pred_check
      _
    $region7: #{tpu_custom_call.1} parent=1 // pred_check_branch
      %22 = sbr.rel (0) target = $region9
    $region8: #{tpu_custom_call.1} parent=1 // pred_region
      %s24 = ssub.s32 240, 240
      %25 = vsyncadd [#allocation6], %s24
      %s26 = sshll.u32 [#allocation5], 4
      %s27 = int_to_ptr.vmem [resolvable:$true] %s26
      %32 = dma.hbm_to_vmem [thread:$0]  %s1, 240, %s27, [#allocation6], 48, 48, 3
    $region9: #{tpu_custom_call.1} parent=1 // pred_fallthru
      _
    // Predicated region
    $region10: #{tpu_custom_call.1} parent=1 // pred_check
      _
    $region11: #{tpu_custom_call.1} parent=1 // pred_check_branch
      %34 = sbr.rel (0) target = $region13
    $region12: #{tpu_custom_call.1} parent=1 // pred_region
      %s36 = ssub.s32 384, 384
      %37 = vsyncadd [#allocation6], %s36
      %s39 = sshll.u32 [#allocation7], 4
      %s40 = int_to_ptr.vmem [resolvable:$true] %s39
      %42 = dma.hbm_to_vmem [thread:$0]  %s2, 384, %s40, [#allocation6]
    $region13: #{tpu_custom_call.1} parent=1 // pred_fallthru
      _
    // Predicated region
    $region14: #{tpu_custom_call.1} parent=1 // pred_check
      _
    $region15: #{tpu_custom_call.1} parent=1 // pred_check_branch
      %44 = sbr.rel (0) target = $region17
    $region16: #{tpu_custom_call.1} parent=1 // pred_region
      %45 = dma.done [#allocation3], 128
    $region17: #{tpu_custom_call.1} parent=1 // pred_fallthru
      _
    // Predicated region
    $region18: #{tpu_custom_call.1} parent=1 // pred_check
      _
    $region19: #{tpu_custom_call.1} parent=1 // pred_check_branch
      %47 = sbr.rel (0) target = $region21
    $region20: #{tpu_custom_call.1} parent=1 // pred_region
      %48 = dma.done [#allocation6], 240
    $region21: #{tpu_custom_call.1} parent=1 // pred_fallthru
      _
    // Predicated region
    $region22: #{tpu_custom_call.1} parent=1 // pred_check
      _
    $region23: #{tpu_custom_call.1} parent=1 // pred_check_branch
      %50 = sbr.rel (0) target = $region25
    $region24: #{tpu_custom_call.1} parent=1 // pred_region
      %51 = dma.done [#allocation6], 384
    $region25: #{tpu_custom_call.1} parent=1 // pred_fallthru
      _
    %v52 = vld [vmem:[#allocation7] sm:$0xff]
    %v53 = vld [vmem:[#allocation7 + $0x8] sm:$0xff]
    %v54 = vld [vmem:[#allocation7 + $0x10] sm:$0xff]
    %v55 = vld [vmem:[#allocation5] sm:$0x7]
    %v57 = vlaneseq
    %v58 = vshrl.u32 %v57, 7
    %v59 = vsub.s32 0, %v58
    %v60 = vrot.slane %v55, %v59
    %v61 = vlaneseq
    %v62 = vshrl.u32 %v61, 7
    %v63 = vsub.s32 1, %v62
    %v64 = vrot.slane %v55, %v63
    %v65 = vlaneseq
    %v66 = vshrl.u32 %v65, 7
    %v67 = vsub.s32 2, %v66
    %v68 = vrot.slane %v55, %v67
    %v72 = vmul.f32 %v52, %v60
    %v73 = vmul.f32 %v53, %v64
    %v74 = vmul.f32 %v54, %v68
    %s75 = scalar_lea.vmem [#allocation5], 3
    %v76 = vld [vmem:[%s75] sm:$0x7]
    %v78 = vlaneseq
    %v79 = vshrl.u32 %v78, 7
    %v80 = vsub.s32 0, %v79
    %v81 = vrot.slane %v76, %v80
    %v82 = vlaneseq
    %v83 = vshrl.u32 %v82, 7
    %v84 = vsub.s32 1, %v83
    %v85 = vrot.slane %v76, %v84
    %v86 = vlaneseq
    %v87 = vshrl.u32 %v86, 7
    %v88 = vsub.s32 2, %v87
    %v89 = vrot.slane %v76, %v88
    %90 = vrot.lane.b32.xlu0 %v81, 1
    %v91 = vpop.permute.xlu0 %90
    %92 = vrot.lane.b32.xlu0 %v85, 1
    %v93 = vpop.permute.xlu0 %92
    %94 = vrot.lane.b32.xlu0 %v89, 1
    %v95 = vpop.permute.xlu0 %94
    %vm96 = vcmask 7168
    %v97 = vsel %vm96, %v91, %v93
    %v98 = vsel %vm96, %v93, %v95
    %v102 = vmul.f32 %v52, %v91
    %v103 = vmul.f32 %v53, %v97
    %v104 = vmul.f32 %v54, %v98
    %s105 = scalar_lea.vmem [#allocation5], 9
    %v106 = vld [vmem:[%s105] sm:$0x7]
    %v108 = vlaneseq
    %v109 = vshrl.u32 %v108, 7
    %v110 = vsub.s32 0, %v109
    %v111 = vrot.slane %v106, %v110
    %v112 = vlaneseq
    %v113 = vshrl.u32 %v112, 7
    %v114 = vsub.s32 1, %v113
    %v115 = vrot.slane %v106, %v114
    %v116 = vlaneseq
    %v117 = vshrl.u32 %v116, 7
    %v118 = vsub.s32 2, %v117
    %v119 = vrot.slane %v106, %v118
    %120 = vrot.lane.b32.xlu0 %v111, 3
    %v121 = vpop.permute.xlu0 %120
    %122 = vrot.lane.b32.xlu0 %v115, 3
    %v123 = vpop.permute.xlu0 %122
    %124 = vrot.lane.b32.xlu0 %v119, 3
    %v125 = vpop.permute.xlu0 %124
    %vm126 = vcmask 23552
    %v127 = vsel %vm126, %v121, %v123
    %v128 = vsel %vm126, %v123, %v125
    %v132 = vmul.f32 %v52, %v121
    %v133 = vmul.f32 %v53, %v127
    %v134 = vmul.f32 %v54, %v128
    %s135 = scalar_lea.vmem [#allocation5], 12
    %v136 = vld [vmem:[%s135] sm:$0x7]
    %v138 = vlaneseq
    %v139 = vshrl.u32 %v138, 7
    %v140 = vsub.s32 0, %v139
    %v141 = vrot.slane %v136, %v140
    %v142 = vlaneseq
    %v143 = vshrl.u32 %v142, 7
    %v144 = vsub.s32 1, %v143
    %v145 = vrot.slane %v136, %v144
    %v146 = vlaneseq
    %v147 = vshrl.u32 %v146, 7
    %v148 = vsub.s32 2, %v147
    %v149 = vrot.slane %v136, %v148
    %150 = vrot.lane.b32.xlu0 %v141, 4
    %v151 = vpop.permute.xlu0 %150
    %152 = vrot.lane.b32.xlu0 %v145, 4
    %v153 = vpop.permute.xlu0 %152
    %154 = vrot.lane.b32.xlu0 %v149, 4
    %v155 = vpop.permute.xlu0 %154
    %vm156 = vcmask 31744
    %v157 = vsel %vm156, %v151, %v153
    %v158 = vsel %vm156, %v153, %v155
    %v162 = vmul.f32 %v52, %v151
    %v163 = vmul.f32 %v53, %v157
    %v164 = vmul.f32 %v54, %v158
    %v165 = vld [vmem:[#allocation2] sm:$0xff]
    %167 = vset.pattern.permute.xlu0 0
    %168 = vperm.xlu0 %167, %v165
    %v169 = vpop.permute.xlu0 %168
    %v171 = vadd.f32 %v72, %v169
    %v172 = vadd.f32 %v73, %v169
    %v173 = vsub.f32 %v72, %v169
    %v174 = vsub.f32 %v73, %v169
    %175 = vset.pattern.permute.xlu0 1
    %176 = vperm.xlu0 %175, %v165
    %v177 = vpop.permute.xlu0 %176
    %v179 = vadd.f32 %v102, %v177
    %v180 = vadd.f32 %v103, %v177
    %v181 = vadd.f32 %v104, %v177
    %185 = vrot.lane.b32.xlu0 %v179, 127
    %v186 = vpop.permute.xlu0 %185
    %187 = vrot.lane.b32.xlu0 %v180, 127
    %v188 = vpop.permute.xlu0 %187
    %189 = vrot.lane.b32.xlu0 %v181, 127
    %v190 = vpop.permute.xlu0 %189
    %vm191 = vcmask 1039360
    %v192 = vsel %vm191, %v186, %v188
    %v193 = vsel %vm191, %v188, %v190
    %v196 = vmax.f32 %v171, %v192
    %v197 = vmax.f32 %v172, %v193
    %v198 = vsub.f32 %v102, %v177
    %v199 = vsub.f32 %v103, %v177
    %v200 = vsub.f32 %v104, %v177
    %204 = vrot.lane.b32.xlu0 %v198, 127
    %v205 = vpop.permute.xlu0 %204
    %206 = vrot.lane.b32.xlu0 %v199, 127
    %v207 = vpop.permute.xlu0 %206
    %208 = vrot.lane.b32.xlu0 %v200, 127
    %v209 = vpop.permute.xlu0 %208
    %v210 = vsel %vm191, %v205, %v207
    %v211 = vsel %vm191, %v207, %v209
    %v214 = vmin.f32 %v173, %v210
    %v215 = vmin.f32 %v174, %v211
    %216 = vset.pattern.permute.xlu0 2
    %217 = vperm.xlu0 %216, %v165
    %v218 = vpop.permute.xlu0 %217
    %v220 = vadd.f32 %v52, %v218
    %v221 = vadd.f32 %v53, %v218
    %v222 = vadd.f32 %v54, %v218
    %226 = vrot.lane.b32.xlu0 %v220, 126
    %v227 = vpop.permute.xlu0 %226
    %228 = vrot.lane.b32.xlu0 %v221, 126
    %v229 = vpop.permute.xlu0 %228
    %230 = vrot.lane.b32.xlu0 %v222, 126
    %v231 = vpop.permute.xlu0 %230
    %vm232 = vcmask 1031168
    %v233 = vsel %vm232, %v227, %v229
    %v234 = vsel %vm232, %v229, %v231
    %v237 = vmax.f32 %v196, %v233
    %v238 = vmax.f32 %v197, %v234
    %v239 = vsub.f32 %v52, %v218
    %v240 = vsub.f32 %v53, %v218
    %v241 = vsub.f32 %v54, %v218
    %245 = vrot.lane.b32.xlu0 %v239, 126
    %v246 = vpop.permute.xlu0 %245
    %247 = vrot.lane.b32.xlu0 %v240, 126
    %v248 = vpop.permute.xlu0 %247
    %249 = vrot.lane.b32.xlu0 %v241, 126
    %v250 = vpop.permute.xlu0 %249
    %v251 = vsel %vm232, %v246, %v248
    %v252 = vsel %vm232, %v248, %v250
    %v255 = vmin.f32 %v214, %v251
    %v256 = vmin.f32 %v215, %v252
    %257 = vset.pattern.permute.xlu0 3
    %258 = vperm.xlu0 %257, %v165
    %v259 = vpop.permute.xlu0 %258
    %v261 = vadd.f32 %v132, %v259
    %v262 = vadd.f32 %v133, %v259
    %v263 = vadd.f32 %v134, %v259
    %267 = vrot.lane.b32.xlu0 %v261, 125
    %v268 = vpop.permute.xlu0 %267
    %269 = vrot.lane.b32.xlu0 %v262, 125
    %v270 = vpop.permute.xlu0 %269
    %271 = vrot.lane.b32.xlu0 %v263, 125
    %v272 = vpop.permute.xlu0 %271
    %vm273 = vcmask 1022976
    %v274 = vsel %vm273, %v268, %v270
    %v275 = vsel %vm273, %v270, %v272
    %v278 = vmax.f32 %v237, %v274
    %v279 = vmax.f32 %v238, %v275
    %v280 = vsub.f32 %v132, %v259
    %v281 = vsub.f32 %v133, %v259
    %v282 = vsub.f32 %v134, %v259
    %286 = vrot.lane.b32.xlu0 %v280, 125
    %v287 = vpop.permute.xlu0 %286
    %288 = vrot.lane.b32.xlu0 %v281, 125
    %v289 = vpop.permute.xlu0 %288
    %290 = vrot.lane.b32.xlu0 %v282, 125
    %v291 = vpop.permute.xlu0 %290
    %v292 = vsel %vm273, %v287, %v289
    %v293 = vsel %vm273, %v289, %v291
    %v296 = vmin.f32 %v255, %v292
    %v297 = vmin.f32 %v256, %v293
    %298 = vset.pattern.permute.xlu0 4
    %299 = vperm.xlu0 %298, %v165
    %v300 = vpop.permute.xlu0 %299
    %v302 = vadd.f32 %v162, %v300
    %v303 = vadd.f32 %v163, %v300
    %v304 = vadd.f32 %v164, %v300
    %308 = vrot.lane.b32.xlu0 %v302, 124
    %v309 = vpop.permute.xlu0 %308
    %310 = vrot.lane.b32.xlu0 %v303, 124
    %v311 = vpop.permute.xlu0 %310
    %312 = vrot.lane.b32.xlu0 %v304, 124
    %v313 = vpop.permute.xlu0 %312
    %vm314 = vcmask 1014784
    %v315 = vsel %vm314, %v309, %v311
    %v316 = vsel %vm314, %v311, %v313
    %v319 = vmax.f32 %v278, %v315
    %v320 = vmax.f32 %v279, %v316
    %v321 = vsub.f32 %v162, %v300
    %v322 = vsub.f32 %v163, %v300
    %v323 = vsub.f32 %v164, %v300
    %327 = vrot.lane.b32.xlu0 %v321, 124
    %v328 = vpop.permute.xlu0 %327
    %329 = vrot.lane.b32.xlu0 %v322, 124
    %v330 = vpop.permute.xlu0 %329
    %331 = vrot.lane.b32.xlu0 %v323, 124
    %v332 = vpop.permute.xlu0 %331
    %v333 = vsel %vm314, %v328, %v330
    %v334 = vsel %vm314, %v330, %v332
    %v337 = vmin.f32 %v296, %v333
    %v338 = vmin.f32 %v297, %v334
    %339 = vset.pattern.permute.xlu0 5
    %340 = vperm.xlu0 %339, %v165
    %v341 = vpop.permute.xlu0 %340
    %v343 = vadd.f32 %v72, %v341
    %v344 = vadd.f32 %v73, %v341
    %v345 = vadd.f32 %v74, %v341
    %349 = vrot.lane.b32.xlu0 %v343, 112
    %v350 = vpop.permute.xlu0 %349
    %351 = vrot.lane.b32.xlu0 %v344, 112
    %v352 = vpop.permute.xlu0 %351
    %353 = vrot.lane.b32.xlu0 %v345, 112
    %v354 = vpop.permute.xlu0 %353
    %vm355 = vcmask 916480
    %v356 = vsel %vm355, %v350, %v352
    %v357 = vsel %vm355, %v352, %v354
    %v360 = vmax.f32 %v319, %v356
    %v361 = vmax.f32 %v320, %v357
    %v362 = vsub.f32 %v72, %v341
    %v363 = vsub.f32 %v73, %v341
    %v364 = vsub.f32 %v74, %v341
    %368 = vrot.lane.b32.xlu0 %v362, 112
    %v369 = vpop.permute.xlu0 %368
    %370 = vrot.lane.b32.xlu0 %v363, 112
    %v371 = vpop.permute.xlu0 %370
    %372 = vrot.lane.b32.xlu0 %v364, 112
    %v373 = vpop.permute.xlu0 %372
    %v374 = vsel %vm355, %v369, %v371
    %v375 = vsel %vm355, %v371, %v373
    %v378 = vmin.f32 %v337, %v374
    %v379 = vmin.f32 %v338, %v375
    %380 = vset.pattern.permute.xlu0 6
    %381 = vperm.xlu0 %380, %v165
    %v382 = vpop.permute.xlu0 %381
    %v384 = vadd.f32 %v102, %v382
    %v385 = vadd.f32 %v103, %v382
    %v386 = vadd.f32 %v104, %v382
    %390 = vrot.lane.b32.xlu0 %v384, 111
    %v391 = vpop.permute.xlu0 %390
    %392 = vrot.lane.b32.xlu0 %v385, 111
    %v393 = vpop.permute.xlu0 %392
    %394 = vrot.lane.b32.xlu0 %v386, 111
    %v395 = vpop.permute.xlu0 %394
    %vm396 = vcmask 908288
    %v397 = vsel %vm396, %v391, %v393
    %v398 = vsel %vm396, %v393, %v395
    %v401 = vmax.f32 %v360, %v397
    %v402 = vmax.f32 %v361, %v398
    %v403 = vsub.f32 %v102, %v382
    %v404 = vsub.f32 %v103, %v382
    %v405 = vsub.f32 %v104, %v382
    %409 = vrot.lane.b32.xlu0 %v403, 111
    %v410 = vpop.permute.xlu0 %409
    %411 = vrot.lane.b32.xlu0 %v404, 111
    %v412 = vpop.permute.xlu0 %411
    %413 = vrot.lane.b32.xlu0 %v405, 111
    %v414 = vpop.permute.xlu0 %413
    %v415 = vsel %vm396, %v410, %v412
    %v416 = vsel %vm396, %v412, %v414
    %v419 = vmin.f32 %v378, %v415
    %v420 = vmin.f32 %v379, %v416
    %421 = vset.pattern.permute.xlu0 7
    %422 = vperm.xlu0 %421, %v165
    %v423 = vpop.permute.xlu0 %422
    %v425 = vadd.f32 %v52, %v423
    %v426 = vadd.f32 %v53, %v423
    %v427 = vadd.f32 %v54, %v423
    %431 = vrot.lane.b32.xlu0 %v425, 110
    %v432 = vpop.permute.xlu0 %431
    %433 = vrot.lane.b32.xlu0 %v426, 110
    %v434 = vpop.permute.xlu0 %433
    %435 = vrot.lane.b32.xlu0 %v427, 110
    %v436 = vpop.permute.xlu0 %435
    %vm437 = vcmask 900096
    %v438 = vsel %vm437, %v432, %v434
    %v439 = vsel %vm437, %v434, %v436
    %v442 = vmax.f32 %v401, %v438
    %v443 = vmax.f32 %v402, %v439
    %v444 = vsub.f32 %v52, %v423
    %v445 = vsub.f32 %v53, %v423
    %v446 = vsub.f32 %v54, %v423
    %450 = vrot.lane.b32.xlu0 %v444, 110
    %v451 = vpop.permute.xlu0 %450
    %452 = vrot.lane.b32.xlu0 %v445, 110
    %v453 = vpop.permute.xlu0 %452
    %454 = vrot.lane.b32.xlu0 %v446, 110
    %v455 = vpop.permute.xlu0 %454
    %v456 = vsel %vm437, %v451, %v453
    %v457 = vsel %vm437, %v453, %v455
    %v460 = vmin.f32 %v419, %v456
    %v461 = vmin.f32 %v420, %v457
    %462 = vset.pattern.permute.xlu0 8
    %463 = vperm.xlu0 %462, %v165
    %v464 = vpop.permute.xlu0 %463
    %v466 = vadd.f32 %v132, %v464
    %v467 = vadd.f32 %v133, %v464
    %v468 = vadd.f32 %v134, %v464
    %472 = vrot.lane.b32.xlu0 %v466, 109
    %v473 = vpop.permute.xlu0 %472
    %474 = vrot.lane.b32.xlu0 %v467, 109
    %v475 = vpop.permute.xlu0 %474
    %476 = vrot.lane.b32.xlu0 %v468, 109
    %v477 = vpop.permute.xlu0 %476
    %vm478 = vcmask 891904
    %v479 = vsel %vm478, %v473, %v475
    %v480 = vsel %vm478, %v475, %v477
    %v483 = vmax.f32 %v442, %v479
    %v484 = vmax.f32 %v443, %v480
    %v485 = vsub.f32 %v132, %v464
    %v486 = vsub.f32 %v133, %v464
    %v487 = vsub.f32 %v134, %v464
    %491 = vrot.lane.b32.xlu0 %v485, 109
    %v492 = vpop.permute.xlu0 %491
    %493 = vrot.lane.b32.xlu0 %v486, 109
    %v494 = vpop.permute.xlu0 %493
    %495 = vrot.lane.b32.xlu0 %v487, 109
    %v496 = vpop.permute.xlu0 %495
    %v497 = vsel %vm478, %v492, %v494
    %v498 = vsel %vm478, %v494, %v496
    %v501 = vmin.f32 %v460, %v497
    %v502 = vmin.f32 %v461, %v498
    %503 = vset.pattern.permute.xlu0 9
    %504 = vperm.xlu0 %503, %v165
    %v505 = vpop.permute.xlu0 %504
    %v507 = vadd.f32 %v162, %v505
    %v508 = vadd.f32 %v163, %v505
    %v509 = vadd.f32 %v164, %v505
    %513 = vrot.lane.b32.xlu0 %v507, 108
    %v514 = vpop.permute.xlu0 %513
    %515 = vrot.lane.b32.xlu0 %v508, 108
    %v516 = vpop.permute.xlu0 %515
    %517 = vrot.lane.b32.xlu0 %v509, 108
    %v518 = vpop.permute.xlu0 %517
    %vm519 = vcmask 883712
    %v520 = vsel %vm519, %v514, %v516
    %v521 = vsel %vm519, %v516, %v518
    %v524 = vmax.f32 %v483, %v520
    %v525 = vmax.f32 %v484, %v521
    %v526 = vsub.f32 %v162, %v505
    %v527 = vsub.f32 %v163, %v505
    %v528 = vsub.f32 %v164, %v505
    %532 = vrot.lane.b32.xlu0 %v526, 108
    %v533 = vpop.permute.xlu0 %532
    %534 = vrot.lane.b32.xlu0 %v527, 108
    %v535 = vpop.permute.xlu0 %534
    %536 = vrot.lane.b32.xlu0 %v528, 108
    %v537 = vpop.permute.xlu0 %536
    %v538 = vsel %vm519, %v533, %v535
    %v539 = vsel %vm519, %v535, %v537
    %v542 = vmin.f32 %v501, %v538
    %v543 = vmin.f32 %v502, %v539
    %544 = vset.pattern.permute.xlu0 10
    %545 = vperm.xlu0 %544, %v165
    %v546 = vpop.permute.xlu0 %545
    %v548 = vadd.f32 %v72, %v546
    %v549 = vadd.f32 %v73, %v546
    %v550 = vadd.f32 %v74, %v546
    %554 = vrot.lane.b32.xlu0 %v548, 96
    %v555 = vpop.permute.xlu0 %554
    %556 = vrot.lane.b32.xlu0 %v549, 96
    %v557 = vpop.permute.xlu0 %556
    %558 = vrot.lane.b32.xlu0 %v550, 96
    %v559 = vpop.permute.xlu0 %558
    %vm560 = vcmask 785408
    %v561 = vsel %vm560, %v555, %v557
    %v562 = vsel %vm560, %v557, %v559
    %v565 = vmax.f32 %v524, %v561
    %v566 = vmax.f32 %v525, %v562
    %v567 = vsub.f32 %v72, %v546
    %v568 = vsub.f32 %v73, %v546
    %v569 = vsub.f32 %v74, %v546
    %573 = vrot.lane.b32.xlu0 %v567, 96
    %v574 = vpop.permute.xlu0 %573
    %575 = vrot.lane.b32.xlu0 %v568, 96
    %v576 = vpop.permute.xlu0 %575
    %577 = vrot.lane.b32.xlu0 %v569, 96
    %v578 = vpop.permute.xlu0 %577
    %v579 = vsel %vm560, %v574, %v576
    %v580 = vsel %vm560, %v576, %v578
    %v583 = vmin.f32 %v542, %v579
    %v584 = vmin.f32 %v543, %v580
    %585 = vset.pattern.permute.xlu0 11
    %586 = vperm.xlu0 %585, %v165
    %v587 = vpop.permute.xlu0 %586
    %v589 = vadd.f32 %v102, %v587
    %v590 = vadd.f32 %v103, %v587
    %v591 = vadd.f32 %v104, %v587
    %595 = vrot.lane.b32.xlu0 %v589, 95
    %v596 = vpop.permute.xlu0 %595
    %597 = vrot.lane.b32.xlu0 %v590, 95
    %v598 = vpop.permute.xlu0 %597
    %599 = vrot.lane.b32.xlu0 %v591, 95
    %v600 = vpop.permute.xlu0 %599
    %vm601 = vcmask 777216
    %v602 = vsel %vm601, %v596, %v598
    %v603 = vsel %vm601, %v598, %v600
    %v606 = vmax.f32 %v565, %v602
    %v607 = vmax.f32 %v566, %v603
    %v608 = vsub.f32 %v102, %v587
    %v609 = vsub.f32 %v103, %v587
    %v610 = vsub.f32 %v104, %v587
    %614 = vrot.lane.b32.xlu0 %v608, 95
    %v615 = vpop.permute.xlu0 %614
    %616 = vrot.lane.b32.xlu0 %v609, 95
    %v617 = vpop.permute.xlu0 %616
    %618 = vrot.lane.b32.xlu0 %v610, 95
    %v619 = vpop.permute.xlu0 %618
    %v620 = vsel %vm601, %v615, %v617
    %v621 = vsel %vm601, %v617, %v619
    %v624 = vmin.f32 %v583, %v620
    %v625 = vmin.f32 %v584, %v621
    %626 = vset.pattern.permute.xlu0 12
    %627 = vperm.xlu0 %626, %v165
    %v628 = vpop.permute.xlu0 %627
    %v630 = vadd.f32 %v52, %v628
    %v631 = vadd.f32 %v53, %v628
    %v632 = vadd.f32 %v54, %v628
    %636 = vrot.lane.b32.xlu0 %v630, 94
    %v637 = vpop.permute.xlu0 %636
    %638 = vrot.lane.b32.xlu0 %v631, 94
    %v639 = vpop.permute.xlu0 %638
    %640 = vrot.lane.b32.xlu0 %v632, 94
    %v641 = vpop.permute.xlu0 %640
    %vm642 = vcmask 769024
    %v643 = vsel %vm642, %v637, %v639
    %v644 = vsel %vm642, %v639, %v641
    %v647 = vmax.f32 %v606, %v643
    %v648 = vmax.f32 %v607, %v644
    %v649 = vsub.f32 %v52, %v628
    %v650 = vsub.f32 %v53, %v628
    %v651 = vsub.f32 %v54, %v628
    %655 = vrot.lane.b32.xlu0 %v649, 94
    %v656 = vpop.permute.xlu0 %655
    %657 = vrot.lane.b32.xlu0 %v650, 94
    %v658 = vpop.permute.xlu0 %657
    %659 = vrot.lane.b32.xlu0 %v651, 94
    %v660 = vpop.permute.xlu0 %659
    %v661 = vsel %vm642, %v656, %v658
    %v662 = vsel %vm642, %v658, %v660
    %v665 = vmin.f32 %v624, %v661
    %v666 = vmin.f32 %v625, %v662
    %667 = vset.pattern.permute.xlu0 13
    %668 = vperm.xlu0 %667, %v165
    %v669 = vpop.permute.xlu0 %668
    %v671 = vadd.f32 %v132, %v669
    %v672 = vadd.f32 %v133, %v669
    %v673 = vadd.f32 %v134, %v669
    %677 = vrot.lane.b32.xlu0 %v671, 93
    %v678 = vpop.permute.xlu0 %677
    %679 = vrot.lane.b32.xlu0 %v672, 93
    %v680 = vpop.permute.xlu0 %679
    %681 = vrot.lane.b32.xlu0 %v673, 93
    %v682 = vpop.permute.xlu0 %681
    %vm683 = vcmask 760832
    %v684 = vsel %vm683, %v678, %v680
    %v685 = vsel %vm683, %v680, %v682
    %v688 = vmax.f32 %v647, %v684
    %v689 = vmax.f32 %v648, %v685
    %v690 = vsub.f32 %v132, %v669
    %v691 = vsub.f32 %v133, %v669
    %v692 = vsub.f32 %v134, %v669
    %696 = vrot.lane.b32.xlu0 %v690, 93
    %v697 = vpop.permute.xlu0 %696
    %698 = vrot.lane.b32.xlu0 %v691, 93
    %v699 = vpop.permute.xlu0 %698
    %700 = vrot.lane.b32.xlu0 %v692, 93
    %v701 = vpop.permute.xlu0 %700
    %v702 = vsel %vm683, %v697, %v699
    %v703 = vsel %vm683, %v699, %v701
    %v706 = vmin.f32 %v665, %v702
    %v707 = vmin.f32 %v666, %v703
    %708 = vset.pattern.permute.xlu0 14
    %709 = vperm.xlu0 %708, %v165
    %v710 = vpop.permute.xlu0 %709
    %v712 = vadd.f32 %v162, %v710
    %v713 = vadd.f32 %v163, %v710
    %v714 = vadd.f32 %v164, %v710
    %718 = vrot.lane.b32.xlu0 %v712, 92
    %v719 = vpop.permute.xlu0 %718
    %720 = vrot.lane.b32.xlu0 %v713, 92
    %v721 = vpop.permute.xlu0 %720
    %722 = vrot.lane.b32.xlu0 %v714, 92
    %v723 = vpop.permute.xlu0 %722
    %vm724 = vcmask 752640
    %v725 = vsel %vm724, %v719, %v721
    %v726 = vsel %vm724, %v721, %v723
    %v729 = vmax.f32 %v688, %v725
    %v730 = vmax.f32 %v689, %v726
    %v731 = vsub.f32 %v162, %v710
    %v732 = vsub.f32 %v163, %v710
    %v733 = vsub.f32 %v164, %v710
    %737 = vrot.lane.b32.xlu0 %v731, 92
    %v738 = vpop.permute.xlu0 %737
    %739 = vrot.lane.b32.xlu0 %v732, 92
    %v740 = vpop.permute.xlu0 %739
    %741 = vrot.lane.b32.xlu0 %v733, 92
    %v742 = vpop.permute.xlu0 %741
    %v743 = vsel %vm724, %v738, %v740
    %v744 = vsel %vm724, %v740, %v742
    %v747 = vmin.f32 %v706, %v743
    %v748 = vmin.f32 %v707, %v744
    %749 = vset.pattern.permute.xlu0 15
    %750 = vperm.xlu0 %749, %v165
    %v751 = vpop.permute.xlu0 %750
    %v753 = vadd.f32 %v72, %v751
    %v754 = vadd.f32 %v73, %v751
    %v755 = vadd.f32 %v74, %v751
    %759 = vrot.lane.b32.xlu0 %v753, 80
    %v760 = vpop.permute.xlu0 %759
    %761 = vrot.lane.b32.xlu0 %v754, 80
    %v762 = vpop.permute.xlu0 %761
    %763 = vrot.lane.b32.xlu0 %v755, 80
    %v764 = vpop.permute.xlu0 %763
    %vm765 = vcmask 654336
    %v766 = vsel %vm765, %v760, %v762
    %v767 = vsel %vm765, %v762, %v764
    %v770 = vmax.f32 %v729, %v766
    %v771 = vmax.f32 %v730, %v767
    %v772 = vsub.f32 %v72, %v751
    %v773 = vsub.f32 %v73, %v751
    %v774 = vsub.f32 %v74, %v751
    %778 = vrot.lane.b32.xlu0 %v772, 80
    %v779 = vpop.permute.xlu0 %778
    %780 = vrot.lane.b32.xlu0 %v773, 80
    %v781 = vpop.permute.xlu0 %780
    %782 = vrot.lane.b32.xlu0 %v774, 80
    %v783 = vpop.permute.xlu0 %782
    %v784 = vsel %vm765, %v779, %v781
    %v785 = vsel %vm765, %v781, %v783
    %v788 = vmin.f32 %v747, %v784
    %v789 = vmin.f32 %v748, %v785
    %790 = vset.pattern.permute.xlu0 16
    %791 = vperm.xlu0 %790, %v165
    %v792 = vpop.permute.xlu0 %791
    %v794 = vadd.f32 %v102, %v792
    %v795 = vadd.f32 %v103, %v792
    %v796 = vadd.f32 %v104, %v792
    %800 = vrot.lane.b32.xlu0 %v794, 79
    %v801 = vpop.permute.xlu0 %800
    %802 = vrot.lane.b32.xlu0 %v795, 79
    %v803 = vpop.permute.xlu0 %802
    %804 = vrot.lane.b32.xlu0 %v796, 79
    %v805 = vpop.permute.xlu0 %804
    %vm806 = vcmask 646144
    %v807 = vsel %vm806, %v801, %v803
    %v808 = vsel %vm806, %v803, %v805
    %v811 = vmax.f32 %v770, %v807
    %v812 = vmax.f32 %v771, %v808
    %v813 = vsub.f32 %v102, %v792
    %v814 = vsub.f32 %v103, %v792
    %v815 = vsub.f32 %v104, %v792
    %819 = vrot.lane.b32.xlu0 %v813, 79
    %v820 = vpop.permute.xlu0 %819
    %821 = vrot.lane.b32.xlu0 %v814, 79
    %v822 = vpop.permute.xlu0 %821
    %823 = vrot.lane.b32.xlu0 %v815, 79
    %v824 = vpop.permute.xlu0 %823
    %v825 = vsel %vm806, %v820, %v822
    %v826 = vsel %vm806, %v822, %v824
    %v829 = vmin.f32 %v788, %v825
    %v830 = vmin.f32 %v789, %v826
    %831 = vset.pattern.permute.xlu0 17
    %832 = vperm.xlu0 %831, %v165
    %v833 = vpop.permute.xlu0 %832
    %v835 = vadd.f32 %v52, %v833
    %v836 = vadd.f32 %v53, %v833
    %v837 = vadd.f32 %v54, %v833
    %841 = vrot.lane.b32.xlu0 %v835, 78
    %v842 = vpop.permute.xlu0 %841
    %843 = vrot.lane.b32.xlu0 %v836, 78
    %v844 = vpop.permute.xlu0 %843
    %845 = vrot.lane.b32.xlu0 %v837, 78
    %v846 = vpop.permute.xlu0 %845
    %vm847 = vcmask 637952
    %v848 = vsel %vm847, %v842, %v844
    %v849 = vsel %vm847, %v844, %v846
    %v852 = vmax.f32 %v811, %v848
    %v853 = vmax.f32 %v812, %v849
    %v854 = vsub.f32 %v52, %v833
    %v855 = vsub.f32 %v53, %v833
    %v856 = vsub.f32 %v54, %v833
    %860 = vrot.lane.b32.xlu0 %v854, 78
    %v861 = vpop.permute.xlu0 %860
    %862 = vrot.lane.b32.xlu0 %v855, 78
    %v863 = vpop.permute.xlu0 %862
    %864 = vrot.lane.b32.xlu0 %v856, 78
    %v865 = vpop.permute.xlu0 %864
    %v866 = vsel %vm847, %v861, %v863
    %v867 = vsel %vm847, %v863, %v865
    %v870 = vmin.f32 %v829, %v866
    %v871 = vmin.f32 %v830, %v867
    %872 = vset.pattern.permute.xlu0 18
    %873 = vperm.xlu0 %872, %v165
    %v874 = vpop.permute.xlu0 %873
    %v876 = vadd.f32 %v132, %v874
    %v877 = vadd.f32 %v133, %v874
    %v878 = vadd.f32 %v134, %v874
    %882 = vrot.lane.b32.xlu0 %v876, 77
    %v883 = vpop.permute.xlu0 %882
    %884 = vrot.lane.b32.xlu0 %v877, 77
    %v885 = vpop.permute.xlu0 %884
    %886 = vrot.lane.b32.xlu0 %v878, 77
    %v887 = vpop.permute.xlu0 %886
    %vm888 = vcmask 629760
    %v889 = vsel %vm888, %v883, %v885
    %v890 = vsel %vm888, %v885, %v887
    %v893 = vmax.f32 %v852, %v889
    %v894 = vmax.f32 %v853, %v890
    %v895 = vsub.f32 %v132, %v874
    %v896 = vsub.f32 %v133, %v874
    %v897 = vsub.f32 %v134, %v874
    %901 = vrot.lane.b32.xlu0 %v895, 77
    %v902 = vpop.permute.xlu0 %901
    %903 = vrot.lane.b32.xlu0 %v896, 77
    %v904 = vpop.permute.xlu0 %903
    %905 = vrot.lane.b32.xlu0 %v897, 77
    %v906 = vpop.permute.xlu0 %905
    %v907 = vsel %vm888, %v902, %v904
    %v908 = vsel %vm888, %v904, %v906
    %v911 = vmin.f32 %v870, %v907
    %v912 = vmin.f32 %v871, %v908
    %913 = vset.pattern.permute.xlu0 19
    %914 = vperm.xlu0 %913, %v165
    %v915 = vpop.permute.xlu0 %914
    %v917 = vadd.f32 %v162, %v915
    %v918 = vadd.f32 %v163, %v915
    %v919 = vadd.f32 %v164, %v915
    %923 = vrot.lane.b32.xlu0 %v917, 76
    %v924 = vpop.permute.xlu0 %923
    %925 = vrot.lane.b32.xlu0 %v918, 76
    %v926 = vpop.permute.xlu0 %925
    %927 = vrot.lane.b32.xlu0 %v919, 76
    %v928 = vpop.permute.xlu0 %927
    %vm929 = vcmask 621568
    %v930 = vsel %vm929, %v924, %v926
    %v931 = vsel %vm929, %v926, %v928
    %v934 = vmax.f32 %v893, %v930
    %v935 = vmax.f32 %v894, %v931
    %v936 = vsub.f32 %v162, %v915
    %v937 = vsub.f32 %v163, %v915
    %v938 = vsub.f32 %v164, %v915
    %942 = vrot.lane.b32.xlu0 %v936, 76
    %v943 = vpop.permute.xlu0 %942
    %944 = vrot.lane.b32.xlu0 %v937, 76
    %v945 = vpop.permute.xlu0 %944
    %946 = vrot.lane.b32.xlu0 %v938, 76
    %v947 = vpop.permute.xlu0 %946
    %v948 = vsel %vm929, %v943, %v945
    %v949 = vsel %vm929, %v945, %v947
    %v952 = vmin.f32 %v911, %v948
    %v953 = vmin.f32 %v912, %v949
    %954 = vset.pattern.permute.xlu0 20
    %955 = vperm.xlu0 %954, %v165
    %v956 = vpop.permute.xlu0 %955
    %v958 = vadd.f32 %v72, %v956
    %v959 = vadd.f32 %v73, %v956
    %v960 = vadd.f32 %v74, %v956
    %964 = vrot.lane.b32.xlu0 %v958, 64
    %v965 = vpop.permute.xlu0 %964
    %966 = vrot.lane.b32.xlu0 %v959, 64
    %v967 = vpop.permute.xlu0 %966
    %968 = vrot.lane.b32.xlu0 %v960, 64
    %v969 = vpop.permute.xlu0 %968
    %vm970 = vcmask 523264
    %v971 = vsel %vm970, %v965, %v967
    %v972 = vsel %vm970, %v967, %v969
    %v975 = vmax.f32 %v934, %v971
    %v976 = vmax.f32 %v935, %v972
    %v977 = vsub.f32 %v72, %v956
    %v978 = vsub.f32 %v73, %v956
    %v979 = vsub.f32 %v74, %v956
    %983 = vrot.lane.b32.xlu0 %v977, 64
    %v984 = vpop.permute.xlu0 %983
    %985 = vrot.lane.b32.xlu0 %v978, 64
    %v986 = vpop.permute.xlu0 %985
    %987 = vrot.lane.b32.xlu0 %v979, 64
    %v988 = vpop.permute.xlu0 %987
    %v989 = vsel %vm970, %v984, %v986
    %v990 = vsel %vm970, %v986, %v988
    %v993 = vmin.f32 %v952, %v989
    %v994 = vmin.f32 %v953, %v990
    %995 = vset.pattern.permute.xlu0 21
    %996 = vperm.xlu0 %995, %v165
    %v997 = vpop.permute.xlu0 %996
    %v999 = vadd.f32 %v102, %v997
    %v1000 = vadd.f32 %v103, %v997
    %v1001 = vadd.f32 %v104, %v997
    %1005 = vrot.lane.b32.xlu0 %v999, 63
    %v1006 = vpop.permute.xlu0 %1005
    %1007 = vrot.lane.b32.xlu0 %v1000, 63
    %v1008 = vpop.permute.xlu0 %1007
    %1009 = vrot.lane.b32.xlu0 %v1001, 63
    %v1010 = vpop.permute.xlu0 %1009
    %vm1011 = vcmask 515072
    %v1012 = vsel %vm1011, %v1006, %v1008
    %v1013 = vsel %vm1011, %v1008, %v1010
    %v1016 = vmax.f32 %v975, %v1012
    %v1017 = vmax.f32 %v976, %v1013
    %v1018 = vsub.f32 %v102, %v997
    %v1019 = vsub.f32 %v103, %v997
    %v1020 = vsub.f32 %v104, %v997
    %1024 = vrot.lane.b32.xlu0 %v1018, 63
    %v1025 = vpop.permute.xlu0 %1024
    %1026 = vrot.lane.b32.xlu0 %v1019, 63
    %v1027 = vpop.permute.xlu0 %1026
    %1028 = vrot.lane.b32.xlu0 %v1020, 63
    %v1029 = vpop.permute.xlu0 %1028
    %v1030 = vsel %vm1011, %v1025, %v1027
    %v1031 = vsel %vm1011, %v1027, %v1029
    %v1034 = vmin.f32 %v993, %v1030
    %v1035 = vmin.f32 %v994, %v1031
    %1036 = vset.pattern.permute.xlu0 22
    %1037 = vperm.xlu0 %1036, %v165
    %v1038 = vpop.permute.xlu0 %1037
    %v1040 = vadd.f32 %v52, %v1038
    %v1041 = vadd.f32 %v53, %v1038
    %v1042 = vadd.f32 %v54, %v1038
    %1046 = vrot.lane.b32.xlu0 %v1040, 62
    %v1047 = vpop.permute.xlu0 %1046
    %1048 = vrot.lane.b32.xlu0 %v1041, 62
    %v1049 = vpop.permute.xlu0 %1048
    %1050 = vrot.lane.b32.xlu0 %v1042, 62
    %v1051 = vpop.permute.xlu0 %1050
    %vm1052 = vcmask 506880
    %v1053 = vsel %vm1052, %v1047, %v1049
    %v1054 = vsel %vm1052, %v1049, %v1051
    %v1057 = vmax.f32 %v1016, %v1053
    %v1058 = vmax.f32 %v1017, %v1054
    %v1059 = vsub.f32 %v52, %v1038
    %v1060 = vsub.f32 %v53, %v1038
    %v1061 = vsub.f32 %v54, %v1038
    %1065 = vrot.lane.b32.xlu0 %v1059, 62
    %v1066 = vpop.permute.xlu0 %1065
    %1067 = vrot.lane.b32.xlu0 %v1060, 62
    %v1068 = vpop.permute.xlu0 %1067
    %1069 = vrot.lane.b32.xlu0 %v1061, 62
    %v1070 = vpop.permute.xlu0 %1069
    %v1071 = vsel %vm1052, %v1066, %v1068
    %v1072 = vsel %vm1052, %v1068, %v1070
    %v1075 = vmin.f32 %v1034, %v1071
    %v1076 = vmin.f32 %v1035, %v1072
    %1077 = vset.pattern.permute.xlu0 23
    %1078 = vperm.xlu0 %1077, %v165
    %v1079 = vpop.permute.xlu0 %1078
    %v1081 = vadd.f32 %v132, %v1079
    %v1082 = vadd.f32 %v133, %v1079
    %v1083 = vadd.f32 %v134, %v1079
    %1087 = vrot.lane.b32.xlu0 %v1081, 61
    %v1088 = vpop.permute.xlu0 %1087
    %1089 = vrot.lane.b32.xlu0 %v1082, 61
    %v1090 = vpop.permute.xlu0 %1089
    %1091 = vrot.lane.b32.xlu0 %v1083, 61
    %v1092 = vpop.permute.xlu0 %1091
    %vm1093 = vcmask 498688
    %v1094 = vsel %vm1093, %v1088, %v1090
    %v1095 = vsel %vm1093, %v1090, %v1092
    %v1098 = vmax.f32 %v1057, %v1094
    %v1099 = vmax.f32 %v1058, %v1095
    %v1100 = vsub.f32 %v132, %v1079
    %v1101 = vsub.f32 %v133, %v1079
    %v1102 = vsub.f32 %v134, %v1079
    %1106 = vrot.lane.b32.xlu0 %v1100, 61
    %v1107 = vpop.permute.xlu0 %1106
    %1108 = vrot.lane.b32.xlu0 %v1101, 61
    %v1109 = vpop.permute.xlu0 %1108
    %1110 = vrot.lane.b32.xlu0 %v1102, 61
    %v1111 = vpop.permute.xlu0 %1110
    %v1112 = vsel %vm1093, %v1107, %v1109
    %v1113 = vsel %vm1093, %v1109, %v1111
    %v1116 = vmin.f32 %v1075, %v1112
    %v1117 = vmin.f32 %v1076, %v1113
    %1118 = vset.pattern.permute.xlu0 24
    %1119 = vperm.xlu0 %1118, %v165
    %v1120 = vpop.permute.xlu0 %1119
    %v1122 = vadd.f32 %v162, %v1120
    %v1123 = vadd.f32 %v163, %v1120
    %v1124 = vadd.f32 %v164, %v1120
    %1128 = vrot.lane.b32.xlu0 %v1122, 60
    %v1129 = vpop.permute.xlu0 %1128
    %1130 = vrot.lane.b32.xlu0 %v1123, 60
    %v1131 = vpop.permute.xlu0 %1130
    %1132 = vrot.lane.b32.xlu0 %v1124, 60
    %v1133 = vpop.permute.xlu0 %1132
    %vm1134 = vcmask 490496
    %v1135 = vsel %vm1134, %v1129, %v1131
    %v1136 = vsel %vm1134, %v1131, %v1133
    %v1139 = vmax.f32 %v1098, %v1135
    %v1140 = vmax.f32 %v1099, %v1136
    %v1141 = vsub.f32 %v162, %v1120
    %v1142 = vsub.f32 %v163, %v1120
    %v1143 = vsub.f32 %v164, %v1120
    %1147 = vrot.lane.b32.xlu0 %v1141, 60
    %v1148 = vpop.permute.xlu0 %1147
    %1149 = vrot.lane.b32.xlu0 %v1142, 60
    %v1150 = vpop.permute.xlu0 %1149
    %1151 = vrot.lane.b32.xlu0 %v1143, 60
    %v1152 = vpop.permute.xlu0 %1151
    %v1153 = vsel %vm1134, %v1148, %v1150
    %v1154 = vsel %vm1134, %v1150, %v1152
    %v1157 = vmin.f32 %v1116, %v1153
    %v1158 = vmin.f32 %v1117, %v1154
    %v1159 = vsub.f32 %v1139, %v1157
    %v1160 = vsub.f32 %v1140, %v1158
    %vm1161 = vcmask 1043456
    %v1162 = vsel %vm1161, %v1159, -inf
    %v1163 = vrot.slane %v1162, 4
    %v1164 = vmax.f32 %v1162, %v1163
    %v1165 = vrot.slane %v1164, 2
    %v1166 = vmax.f32 %v1164, %v1165
    %v1167 = vrot.slane %v1166, 1
    %v1168 = vmax.f32 %v1166, %v1167
    %v1169 = vsel %vm1161, %v1160, -inf
    %v1170 = vrot.slane %v1169, 4
    %v1171 = vmax.f32 %v1169, %v1170
    %v1172 = vrot.slane %v1171, 2
    %v1173 = vmax.f32 %v1171, %v1172
    %v1174 = vrot.slane %v1173, 1
    %v1175 = vmax.f32 %v1173, %v1174
    %v1176 = vsub.f32 %v1159, %v1168
    %v1177 = vsub.f32 %v1160, %v1175
    %v1178 = vmul.f32 %v1176, 1.442695
    %v1179 = vpow.pop %v1178
    %v1180 = vmul.f32 %v1177, 1.442695
    %v1181 = vpow.pop %v1180
    %v1182 = vsel %vm1161, %v1179, 0.0
    %v1183 = vrot.slane %v1182, 4
    %v1184 = vadd.f32 %v1182, %v1183
    %v1185 = vrot.slane %v1184, 2
    %v1186 = vadd.f32 %v1184, %v1185
    %v1187 = vrot.slane %v1186, 1
    %v1188 = vadd.f32 %v1186, %v1187
    %v1189 = vsel %vm1161, %v1181, 0.0
    %v1190 = vrot.slane %v1189, 4
    %v1191 = vadd.f32 %v1189, %v1190
    %v1192 = vrot.slane %v1191, 2
    %v1193 = vadd.f32 %v1191, %v1192
    %v1194 = vrot.slane %v1193, 1
    %v1195 = vadd.f32 %v1193, %v1194
    %v1196 = vrcp.pop %v1188
    %v1197 = vrcp.pop %v1195
    %v1198 = vmul.f32 %v1188, %v1196
    %v1199 = vmul.f32 %v1195, %v1197
    %v1200 = vsub.f32 2.0, %v1198
    %v1201 = vsub.f32 2.0, %v1199
    %v1202 = vmul.f32 %v1196, %v1200
    %v1203 = vmul.f32 %v1197, %v1201
    %v1204 = vmul.f32 %v1179, %v1202
    %v1205 = vmul.f32 %v1181, %v1203
    %vm1206 = vcmask 1047556
    %v1207 = vsel %vm1206, %v1159, -inf
    %v1208 = vrot.slane %v1207, 4
    %v1209 = vmax.f32 %v1207, %v1208
    %v1210 = vrot.slane %v1209, 2
    %v1211 = vmax.f32 %v1209, %v1210
    %v1212 = vrot.slane %v1211, 1
    %v1213 = vmax.f32 %v1211, %v1212
    %v1214 = vsel %vm1206, %v1160, -inf
    %v1215 = vrot.slane %v1214, 4
    %v1216 = vmax.f32 %v1214, %v1215
    %v1217 = vrot.slane %v1216, 2
    %v1218 = vmax.f32 %v1216, %v1217
    %v1219 = vrot.slane %v1218, 1
    %v1220 = vmax.f32 %v1218, %v1219
    %v1221 = vsub.f32 %v1159, %v1213
    %v1222 = vsub.f32 %v1160, %v1220
    %v1223 = vmul.f32 %v1221, 1.442695
    %v1224 = vpow.pop %v1223
    %v1225 = vmul.f32 %v1222, 1.442695
    %v1226 = vpow.pop %v1225
    %v1229 = vrot.slane %v1224, 4
    %v1230 = vrot.slane %v1226, 4
    %v1233 = vsel %vm1161, %v1229, 0.0
    %v1234 = vrot.slane %v1233, 4
    %v1235 = vadd.f32 %v1233, %v1234
    %v1236 = vrot.slane %v1235, 2
    %v1237 = vadd.f32 %v1235, %v1236
    %v1238 = vrot.slane %v1237, 1
    %v1239 = vadd.f32 %v1237, %v1238
    %v1240 = vsel %vm1161, %v1230, 0.0
    %v1241 = vrot.slane %v1240, 4
    %v1242 = vadd.f32 %v1240, %v1241
    %v1243 = vrot.slane %v1242, 2
    %v1244 = vadd.f32 %v1242, %v1243
    %v1245 = vrot.slane %v1244, 1
    %v1246 = vadd.f32 %v1244, %v1245
    %v1247 = vrcp.pop %v1239
    %v1248 = vrcp.pop %v1246
    %v1249 = vmul.f32 %v1239, %v1247
    %v1250 = vmul.f32 %v1246, %v1248
    %v1251 = vsub.f32 2.0, %v1249
    %v1252 = vsub.f32 2.0, %v1250
    %v1253 = vmul.f32 %v1247, %v1251
    %v1254 = vmul.f32 %v1248, %v1252
    %v1255 = vmul.f32 %v1224, %v1253
    %v1256 = vmul.f32 %v1226, %v1254
    %v1257 = vsel %vm1161, %v1204, %v1255
    %v1258 = vsel %vm1161, %v1205, %v1256
    %1259 = vst [vmem:[#allocation8] sm:$0xff] %v1257
    %1260 = vst [vmem:[#allocation8 + $0x8] sm:$0xff] %v1258
    // Predicated region
    $region26: #{tpu_custom_call.1} parent=1 // pred_check
      _
    $region27: #{tpu_custom_call.1} parent=1 // pred_check_branch
      %1262 = sbr.rel (0) target = $region29
    $region28: #{tpu_custom_call.1} parent=1 // pred_region
      %s1264 = ssub.s32 256, 256
      %1265 = vsyncadd [#allocation4], %s1264
      %s1267 = sshll.u32 [#allocation8], 4
      %s1268 = int_to_ptr.vmem [resolvable:$true] %s1267
      %1270 = dma.vmem_to_hbm [thread:$0]  %s1268, 256, %s3, [#allocation4]
    $region29: #{tpu_custom_call.1} parent=1 // pred_fallthru
      _
    // Predicated region
    $region30: #{tpu_custom_call.1} parent=1 // pred_check
      _
    $region31: #{tpu_custom_call.1} parent=1 // pred_check_branch
      %1272 = sbr.rel (0) target = $region33
    $region32: #{tpu_custom_call.1} parent=1 // pred_region
      %1273 = dma.done [#allocation4], 256
    $region33: #{tpu_custom_call.1} parent=1 // pred_fallthru
      _
    %1274 = vsyncpa [#allocation3], 1
    %1275 = vsyncpa [#allocation6], 1
    %1276 = vsyncpa [#allocation4], 1

</llo_original>
